<compile_context>
chip_gen: v7x
topology: tpu7x:2x2x1
jax: 0.10.0
libtpu: 0.0.40
codegen_flags: <defaults>
</compile_context>

<pallas_src>
import jax
import jax.numpy as jnp
from jax.experimental import pallas as pl
from jax.experimental.pallas import tpu as pltpu


def _round_up(x, m):
    return (x + m - 1) // m * m


# ---------------------------------------------------------------------------
# Kernel 1: linear sentence encoder  emb = x @ W + b  (support & query fused)
# ---------------------------------------------------------------------------
def _encoder_kernel(x_ref, w_ref, b_ref, o_ref):
    o_ref[...] = (
        jnp.dot(x_ref[...], w_ref[...], preferred_element_type=jnp.float32)
        + b_ref[...]
    )


def encode(x, w, b, *, tm=128):
    """x: (M, D) f32, w: (D, H) f32, b: (H,) f32 -> (M, H) f32."""
    M, D = x.shape
    Dw, H = w.shape
    assert D == Dw
    tm = min(tm, _round_up(M, 8))
    m_pad = _round_up(M, tm)
    if m_pad != M:
        x = jnp.pad(x, ((0, m_pad - M), (0, 0)))
    out = pl.pallas_call(
        _encoder_kernel,
        out_shape=jax.ShapeDtypeStruct((m_pad, H), jnp.float32),
        grid=(m_pad // tm,),
        in_specs=[
            pl.BlockSpec((tm, D), lambda i: (i, 0)),
            pl.BlockSpec((D, H), lambda i: (0, 0)),   # constant index -> resident
            pl.BlockSpec((1, H), lambda i: (0, 0)),
        ],
        out_specs=pl.BlockSpec((tm, H), lambda i: (i, 0)),
        compiler_params=pltpu.CompilerParams(
            dimension_semantics=("parallel",)
        ),
    )(x, w, b.reshape(1, H))
    # TODO(synk): for production D/H (512-1024) add H/D grid axes with an f32
    # VMEM accumulator (128/256-aligned tiles) and optionally bf16 inputs.
    return out[:M] if m_pad != M else out


# ---------------------------------------------------------------------------
# Kernel 2: ProtoNet distance head, grid over episodes (B)
# ---------------------------------------------------------------------------
def _proto_kernel(s_ref, q_ref, logits_ref, pred_ref, proto_ref):
    n, _, h = s_ref.shape           # (N, K, H)
    q_cnt = q_ref.shape[0]          # Q
    np_ = logits_ref.shape[-1]      # lane-padded class axis (multiple of 128)

    # Prototype mean over K, written into a zero-padded (NP, H) scratch so the
    # distance matmul emits a lane-dense (Q, NP) tile straight from the MXU.
    proto_ref[...] = jnp.zeros_like(proto_ref)
    proto_ref[:n, :] = jnp.mean(s_ref[...], axis=1)
    proto = proto_ref[...]                                  # (NP, H)
    q = q_ref[...]                                          # (Q, H)

    # -||q - p||^2 = 2 q.p - ||p||^2 - ||q||^2 ; H reductions on the MXU, f32 acc.
    cross = jax.lax.dot_general(
        q, proto, (((1,), (1,)), ((), ())),
        preferred_element_type=jnp.float32)                 # (Q, NP)
    pnorm = jax.lax.dot_general(
        jnp.ones((1, h), jnp.float32), proto * proto,
        (((1,), (1,)), ((), ())),
        preferred_element_type=jnp.float32)                 # (1, NP)
    qnorm = jnp.sum(q * q, axis=-1, keepdims=True)          # (Q, 1)
    dist = 2.0 * cross - pnorm - qnorm                      # (Q, NP)

    lane = jax.lax.broadcasted_iota(jnp.int32, (q_cnt, np_), 1)
    valid = lane < n
    big = jnp.float32(1e30)

    # logits[..., :N] = dist, logits[..., N] = min - 1 (extra pad columns hold
    # the same value and are sliced off in the wrapper) -> lane-dense store.
    minn = jnp.min(jnp.where(valid, dist, big), axis=-1, keepdims=True)
    logits_ref[...] = jnp.where(valid, dist, minn - 1.0)

    # argmax over the N real classes only (first index on ties, like torch.max);
    # the appended min-1 "none" column can never be the max.
    dist_m = jnp.where(valid, dist, -big)
    maxv = jnp.max(dist_m, axis=-1, keepdims=True)
    cand = jnp.where(dist_m == maxv, lane, np_)
    pred_ref[...] = jnp.min(cand, axis=-1, keepdims=True).astype(jnp.int32)


def proto_head(support_emb, query_emb, N, K, total_Q):
    """support_emb: (B*N*K, H), query_emb: (B*total_Q, H)."""
    H = support_emb.shape[-1]
    B = support_emb.shape[0] // (N * K)
    s = support_emb.reshape(B, N, K, H)
    q = query_emb.reshape(B, total_Q, H)
    NP = _round_up(N + 1, 128)      # lane-dense class axis

    logits_pad, pred = pl.pallas_call(
        _proto_kernel,
        out_shape=(
            jax.ShapeDtypeStruct((B, total_Q, NP), jnp.float32),
            jax.ShapeDtypeStruct((B, total_Q, 1), jnp.int32),
        ),
        grid=(B,),
        in_specs=[
            pl.BlockSpec((None, N, K, H), lambda b: (b, 0, 0, 0)),
            pl.BlockSpec((None, total_Q, H), lambda b: (b, 0, 0)),
        ],
        out_specs=(
            pl.BlockSpec((None, total_Q, NP), lambda b: (b, 0, 0)),
            pl.BlockSpec((None, total_Q, 1), lambda b: (b, 0, 0)),
        ),
        scratch_shapes=[pltpu.VMEM((NP, H), jnp.float32)],
        compiler_params=pltpu.CompilerParams(
            dimension_semantics=("parallel",)
        ),
    )(s, q)

    logits = logits_pad[:, :, : N + 1]        # (B, Q, N+1), matches torch.cat
    return logits, pred.reshape(-1)           # pred flattened like torch argmax


# ---------------------------------------------------------------------------
# Full forward (encoder + proto head), mirroring ProtoNet.forward
# ---------------------------------------------------------------------------
def protonet_forward(support_x, query_x, w, b, N, K, total_Q):
    # Fuse the two encoder calls: one matmul over [support; query] so W/b are
    # DMA'd once and the MXU pipeline is filled once with a larger M.
    n_support = support_x.shape[0]
    emb = encode(jnp.concatenate([support_x, query_x], axis=0), w, b)
    support_emb = emb[:n_support]
    query_emb = emb[n_support:]
    # TODO(synk): for mem-bound production sizes, fuse encoder + head into one
    # pallas_call so embeddings never round-trip through HBM.
    return proto_head(support_emb, query_emb, N, K, total_Q)


if __name__ == "__main__":
    # Small deterministic problem: B=2 episodes, N=5 classes, K=4 shots,
    # total_Q=8 queries per episode, input feature dim D=16, hidden H=32.
    B, N, K, total_Q, D, H = 2, 5, 4, 8, 16, 32

    key = jax.random.PRNGKey(0)
    k_s, k_q, k_w, k_b = jax.random.split(key, 4)

    support_x = jax.random.normal(k_s, (B * N * K, D), dtype=jnp.float32)
    query_x = jax.random.normal(k_q, (B * total_Q, D), dtype=jnp.float32)

    # Deterministic "sentence encoder" parameters (simple linear layer).
    w = jax.random.normal(k_w, (D, H), dtype=jnp.float32) * 0.1
    b = jax.random.normal(k_b, (H,), dtype=jnp.float32) * 0.01

    logits, pred = protonet_forward(support_x, query_x, w, b, N, K, total_Q)
    jax.block_until_ready(logits)
    jax.block_until_ready(pred)

    assert logits.shape == (B, total_Q, N + 1)
    assert pred.shape == (B * total_Q,)
    print("KERNEL_OK")
</pallas_src>

<mosaic_0001>
module attributes {stable_mosaic.version = 11 : i64} {
  func.func @_encoder_kernel(%arg0: i32, %arg1: memref<56x16xf32, #tpu.memory_space<vmem>>, %arg2: memref<16x32xf32, #tpu.memory_space<vmem>>, %arg3: memref<1x32xf32, #tpu.memory_space<vmem>>, %arg4: memref<56x32xf32, #tpu.memory_space<vmem>>) attributes {dimension_semantics = [#tpu.dimension_semantics<parallel>], iteration_bounds = array<i64: 1>, scalar_prefetch = 0 : i64, scratch_operands = 0 : i64, tpu.core_type = #tpu.core_type<tc>, window_params = [{transform_indices = @transform_0, window_bounds = array<i64: 56, 16>}, {pipeline_mode = #tpu.pipeline_mode<synchronous>, transform_indices = @transform_1, window_bounds = array<i64: 16, 32>}, {pipeline_mode = #tpu.pipeline_mode<synchronous>, transform_indices = @transform_2, window_bounds = array<i64: 1, 32>}, {transform_indices = @transform_3, window_bounds = array<i64: 56, 32>}]} {
    %c0 = arith.constant 0 : index
    %c0_0 = arith.constant 0 : index
    %0 = vector.load %arg1[%c0, %c0_0] : memref<56x16xf32, #tpu.memory_space<vmem>>, vector<56x16xf32>
    %c0_1 = arith.constant 0 : index
    %c0_2 = arith.constant 0 : index
    %1 = vector.load %arg2[%c0_1, %c0_2] : memref<16x32xf32, #tpu.memory_space<vmem>>, vector<16x32xf32>
    %cst = arith.constant dense<0.000000e+00> : vector<56x32xf32>
    %2 = tpu.matmul %0, %1, %cst {dimension_numbers = #tpu.dot_dimension_numbers<[1], [0], [0], [1], [0, 0, 1, 1], [], []>} : vector<56x16xf32>, vector<16x32xf32>, vector<56x32xf32> -> vector<56x32xf32>
    %c0_3 = arith.constant 0 : index
    %c0_4 = arith.constant 0 : index
    %3 = vector.load %arg3[%c0_3, %c0_4] : memref<1x32xf32, #tpu.memory_space<vmem>>, vector<1x32xf32>
    %4 = vector.broadcast %3 : vector<1x32xf32> to vector<56x32xf32>
    %5 = arith.addf %2, %4 : vector<56x32xf32>
    %c0_5 = arith.constant 0 : index
    %c0_6 = arith.constant 0 : index
    %6 = vector.load %arg4[%c0_5, %c0_6] : memref<56x32xf32, #tpu.memory_space<vmem>>, vector<56x32xf32>
    tpu.vector_store %arg4[%c0_5, %c0_6], %5 {strides = array<i32>} : memref<56x32xf32, #tpu.memory_space<vmem>>, vector<56x32xf32>,
    return
  }
  func.func @transform_0(%arg0: i32) -> (i32, i32) {
    %c0_i32 = arith.constant 0 : i32
    %c0_i32_0 = arith.constant 0 : i32
    return %arg0, %c0_i32 : i32, i32
  }
  func.func @transform_1(%arg0: i32) -> (i32, i32) {
    %c0_i32 = arith.constant 0 : i32
    %c0_i32_0 = arith.constant 0 : i32
    %c0_i32_1 = arith.constant 0 : i32
    return %c0_i32, %c0_i32_0 : i32, i32
  }
  func.func @transform_2(%arg0: i32) -> (i32, i32) {
    %c0_i32 = arith.constant 0 : i32
    %c0_i32_0 = arith.constant 0 : i32
    %c0_i32_1 = arith.constant 0 : i32
    return %c0_i32, %c0_i32_0 : i32, i32
  }
  func.func @transform_3(%arg0: i32) -> (i32, i32) {
    %c0_i32 = arith.constant 0 : i32
    %c0_i32_0 = arith.constant 0 : i32
    return %arg0, %c0_i32 : i32, i32
  }
}

</mosaic_0001>

<llo_original>
// kernel: tpu_custom_call.1
$region0: #{tpu_custom_call.1}
  #allocation0 [shape = 'u32[]', space=smem, size = 0x4, offset = 0x4, fixed_abs, tag = 'smem constant byte address 0x4 - core index']
  #allocation1 [shape = 'u32[144,128]{1,0:T(1,128)}', space=vmem, size = 0x12000, scoped, tag = 'internal scratch']
  %s0 = inlined_call_operand.vmem [shape: f32[56,16], index: 0, kind: input, shape index: {}]
  %s1 = inlined_call_operand.vmem [shape: f32[16,32], index: 1, kind: input, shape index: {}]
  %s2 = inlined_call_operand.vmem [shape: f32[1,32], index: 2, kind: input, shape index: {}]
  %s3 = inlined_call_operand.vmem [shape: f32[56,32], index: 3, kind: output, shape index: {}]
  %s4 = sld [smem:[#allocation0]]
  $region22: #{tpu_custom_call.1} parent=0
    _
  %s6 = ssub.s32 1, %s4
  %s7 = scalar_select 0, %s6, %s4
  // Predicated region
  $region2: #{tpu_custom_call.1} parent=0 // pred_check
    _
  $region3: #{tpu_custom_call.1} parent=0 // pred_check_branch
    %9 = sbr.rel (0) target = $region5
  $region4: #{tpu_custom_call.1} parent=0 // pred_region
    _
  $region5: #{tpu_custom_call.1} parent=0 // pred_fallthru
    _
  // Predicated region
  $region6: #{tpu_custom_call.1} parent=0 // pred_check
    _
  $region7: #{tpu_custom_call.1} parent=0 // pred_check_branch
    %11 = sbr.rel (0) target = $region9
  $region8: #{tpu_custom_call.1} parent=0 // pred_region
    _
  $region9: #{tpu_custom_call.1} parent=0 // pred_fallthru
    _
  // Predicated region
  $region10: #{tpu_custom_call.1} parent=0 // pred_check
    _
  $region11: #{tpu_custom_call.1} parent=0 // pred_check_branch
    %13 = sbr.rel (0) target = $region13
  $region12: #{tpu_custom_call.1} parent=0 // pred_region
    _
  $region13: #{tpu_custom_call.1} parent=0 // pred_fallthru
    _
  %v14 = vld [vmem:[%s0] sm:$0xff]
  %v15 = vld [vmem:[%s0 + $0x8] sm:$0xff]
  %v16 = vld [vmem:[%s0 + $0x10] sm:$0xff]
  %v17 = vld [vmem:[%s0 + $0x18] sm:$0xff]
  %v18 = vld [vmem:[%s0 + $0x20] sm:$0xff]
  %v19 = vld [vmem:[%s0 + $0x28] sm:$0xff]
  %v20 = vld [vmem:[%s0 + $0x30] sm:$0xff]
  %v21 = vld [vmem:[%s1] sm:$0xff]
  %v22 = vld [vmem:[%s1 + $0x8] sm:$0xff]
  %v23 = vld [vmem:[%s2] sm:$0x1]
  %v25 = vlaneseq
  %v26 = vshrl.u32 %v25, 7
  %v27 = vsub.s32 0, %v26
  %v28 = vrot.slane %v23, %v27
  %vm30 = vcmask 130048
  %v32 = vsel %vm30, %v14, 0
  %v35 = vsel %vm30, %v15, 0
  %v38 = vsel %vm30, %v16, 0
  %v41 = vsel %vm30, %v17, 0
  %v44 = vsel %vm30, %v18, 0
  %v47 = vsel %vm30, %v19, 0
  %v50 = vsel %vm30, %v20, 0
  %52 = vmatprep.subr.mxu0 0.0
  %53 = vmatpush1.msra.mxu0 %v21
  %54 = vmatprep.subr.mxu0 0.0
  %55 = vmatpush1.msra.mxu0 %v22
  %56 = vmatprep.subr.mxu0 0.0
  %57 = vmatpush1.msra.mxu0 0.0
  %58 = vmatprep.subr.mxu0 0.0
  %59 = vmatpush1.msra.mxu0 0.0
  %60 = vmatprep.subr.mxu0 0.0
  %61 = vmatpush1.msra.mxu0 0.0
  %62 = vmatprep.subr.mxu0 0.0
  %63 = vmatpush1.msra.mxu0 0.0
  %64 = vmatprep.subr.mxu0 0.0
  %65 = vmatpush1.msra.mxu0 0.0
  %66 = vmatprep.subr.mxu0 0.0
  %67 = vmatpush1.msra.mxu0 0.0
  %68 = vmatprep.subr.mxu0 0.0
  %69 = vmatpush1.msra.mxu0 0.0
  %70 = vmatprep.subr.mxu0 0.0
  %71 = vmatpush1.msra.mxu0 0.0
  %72 = vmatprep.subr.mxu0 0.0
  %73 = vmatpush1.msra.mxu0 0.0
  %74 = vmatprep.subr.mxu0 0.0
  %75 = vmatpush1.msra.mxu0 0.0
  %76 = vmatprep.subr.mxu0 0.0
  %77 = vmatpush1.msra.mxu0 0.0
  %78 = vmatprep.subr.mxu0 0.0
  %79 = vmatpush1.msra.mxu0 0.0
  %80 = vmatprep.subr.mxu0 0.0
  %81 = vmatpush1.msra.mxu0 0.0
  %82 = vmatprep.subr.mxu0 0.0
  %83 = vmatpush1.msra.mxu0 0.0
  %84 = vmatprep.subr.mxu0 0.0
  %85 = vmatpush1.msra.mxu0 0.0
  %86 = vmatprep.subr.mxu0 0.0
  %87 = vmatpush1.msra.mxu0 0.0
  %88 = vmatprep.subr.mxu0 0.0
  %89 = vmatpush1.msra.mxu0 0.0
  %90 = vmatprep.subr.mxu0 0.0
  %91 = vmatpush1.msra.mxu0 0.0
  %92 = vmatprep.subr.mxu0 0.0
  %93 = vmatpush1.msra.mxu0 0.0
  %94 = vmatprep.subr.mxu0 0.0
  %95 = vmatpush1.msra.mxu0 0.0
  %96 = vmatprep.subr.mxu0 0.0
  %97 = vmatpush1.msra.mxu0 0.0
  %98 = vmatprep.subr.mxu0 0.0
  %99 = vmatpush1.msra.mxu0 0.0
  %100 = vmatprep.subr.mxu0 0.0
  %101 = vmatpush1.msra.mxu0 0.0
  %102 = vmatprep.subr.mxu0 0.0
  %103 = vmatpush1.msra.mxu0 0.0
  %104 = vmatprep.subr.mxu0 0.0
  %105 = vmatpush1.msra.mxu0 0.0
  %106 = vmatprep.subr.mxu0 0.0
  %107 = vmatpush1.msra.mxu0 0.0
  %108 = vmatprep.subr.mxu0 0.0
  %109 = vmatpush1.msra.mxu0 0.0
  %110 = vmatprep.subr.mxu0 0.0
  %111 = vmatpush1.msra.mxu0 0.0
  %112 = vmatprep.subr.mxu0 0.0
  %113 = vmatpush1.msra.mxu0 0.0
  %114 = vmatprep.subr.mxu0 0.0
  %115 = vmatpush1.msra.mxu0 0.0
  %116 = vmatprep.mubr.f32.mxu0 0.0
  %117 = vmatmul.mubr.f32.gmra.mrb[0].mxu0 %v32
  %v118 = vpop.f32.mrb[0].mxu0
  %v119 = vadd.f32 %v28, %v118
  %v120 = vpop.f32.mrb[0].mxu0
  %121 = vmatprep.mubr.f32.mxu0 0.0
  %122 = vmatmul.mubr.f32.gmra.mrb[0].mxu0 %v35
  %v123 = vpop.f32.mrb[0].mxu0
  %v124 = vadd.f32 %v28, %v123
  %v125 = vpop.f32.mrb[0].mxu0
  %126 = vmatprep.mubr.f32.mxu0 0.0
  %127 = vmatmul.mubr.f32.gmra.mrb[0].mxu0 %v38
  %v128 = vpop.f32.mrb[0].mxu0
  %v129 = vadd.f32 %v28, %v128
  %v130 = vpop.f32.mrb[0].mxu0
  %131 = vmatprep.mubr.f32.mxu0 0.0
  %132 = vmatmul.mubr.f32.gmra.mrb[0].mxu0 %v41
  %v133 = vpop.f32.mrb[0].mxu0
  %v134 = vadd.f32 %v28, %v133
  %v135 = vpop.f32.mrb[0].mxu0
  %136 = vmatprep.mubr.f32.mxu0 0.0
  %137 = vmatmul.mubr.f32.gmra.mrb[0].mxu0 %v44
  %v138 = vpop.f32.mrb[0].mxu0
  %v139 = vadd.f32 %v28, %v138
  %v140 = vpop.f32.mrb[0].mxu0
  %141 = vmatprep.mubr.f32.mxu0 0.0
  %142 = vmatmul.mubr.f32.gmra.mrb[0].mxu0 %v47
  %v143 = vpop.f32.mrb[0].mxu0
  %v144 = vadd.f32 %v28, %v143
  %v145 = vpop.f32.mrb[0].mxu0
  %146 = vmatprep.mubr.f32.mxu0 0.0
  %147 = vmatmul.mubr.f32.gmra.mrb[0].mxu0 %v50
  %v148 = vpop.f32.mrb[0].mxu0
  %v149 = vadd.f32 %v28, %v148
  %v150 = vpop.f32.mrb[0].mxu0
  %151 = vdwg.mxu0
  %vm152 = vcmask 261120
  %153 = vst.msk [vmem:[%s3] sm:$0xff] %vm152, %v119
  %154 = vst.msk [vmem:[%s3 + $0x8] sm:$0xff] %vm152, %v124
  %155 = vst.msk [vmem:[%s3 + $0x10] sm:$0xff] %vm152, %v129
  %156 = vst.msk [vmem:[%s3 + $0x18] sm:$0xff] %vm152, %v134
  %157 = vst.msk [vmem:[%s3 + $0x20] sm:$0xff] %vm152, %v139
  %158 = vst.msk [vmem:[%s3 + $0x28] sm:$0xff] %vm152, %v144
  %159 = vst.msk [vmem:[%s3 + $0x30] sm:$0xff] %vm152, %v149
  // Predicated region
  $region14: #{tpu_custom_call.1} parent=0 // pred_check
    _
  $region15: #{tpu_custom_call.1} parent=0 // pred_check_branch
    %161 = sbr.rel (0) target = $region17
  $region16: #{tpu_custom_call.1} parent=0 // pred_region
    _
  $region17: #{tpu_custom_call.1} parent=0 // pred_fallthru
    _
  // Predicated region
  $region18: #{tpu_custom_call.1} parent=0 // pred_check
    _
  $region19: #{tpu_custom_call.1} parent=0 // pred_check_branch
    %163 = sbr.rel (0) target = $region21
  $region20: #{tpu_custom_call.1} parent=0 // pred_region
    _
  $region21: #{tpu_custom_call.1} parent=0 // pred_fallthru
    _

</llo_original>
